<compile_context>
chip_gen: v7x
topology: tpu7x:2x2x1
jax: 0.10.0
libtpu: 0.0.40
codegen_flags: <defaults>
</compile_context>

<pallas_src>
import functools

import jax
import jax.numpy as jnp
from jax.experimental import pallas as pl
from jax.experimental.pallas import tpu as pltpu

SUBLANE = 8
RANK_PAD = 128          # LoRA rank padded to a full lane width (lane-dense tiles)
_MIB = 1024 * 1024


def _round_up(x, m):
    return (x + m - 1) // m * m


def _pick_tile(dim, candidates):
    """Pick the tile (multiple of 128) from `candidates` minimizing padding waste.

    Candidates are tried in descending order; ties keep the larger tile.
    """
    best, best_pad = None, None
    for c in candidates:
        pad = _round_up(max(dim, 1), c) - dim
        if best is None or pad < best_pad:
            best, best_pad = c, pad
    return best


def _lora_a_kernel(x_ref, a_ref, mid_ref, acc_ref):
    """mid = x @ A^T, accumulated over K tiles in f32."""
    k = pl.program_id(1)

    @pl.when(k == 0)
    def _init():
        acc_ref[...] = jnp.zeros_like(acc_ref)

    acc_ref[...] += jnp.dot(x_ref[...], a_ref[...],
                            preferred_element_type=jnp.float32)

    @pl.when(k == pl.num_programs(1) - 1)
    def _finalize():
        mid_ref[...] = acc_ref[...].astype(mid_ref.dtype)


def _lora_linear_kernel(x_ref, w_ref, mid_ref, b_ref, *rest, has_bias):
    """o = x @ W^T [+ bias] + mid @ B^T; K-tiled reduction on the base GEMM."""
    if has_bias:
        bias_ref, o_ref, acc_ref = rest
    else:
        o_ref, acc_ref = rest

    k = pl.program_id(2)

    @pl.when(k == 0)
    def _init():
        acc_ref[...] = jnp.zeros_like(acc_ref)

    # Base path: x (tm, tk) @ W^T (tk, tn) -- canonical MXU form, no relayout.
    acc_ref[...] += jnp.dot(x_ref[...], w_ref[...],
                            preferred_element_type=jnp.float32)

    @pl.when(k == pl.num_programs(2) - 1)
    def _finalize():
        # LoRA second matmul + bias once per (i, j) output tile. Casting mid to
        # the weight dtype is exact for f32 weights; for bf16 weights it trades
        # a little LoRA-path precision for full MXU rate.
        mid = mid_ref[...].astype(b_ref.dtype)
        lora = jnp.dot(mid, b_ref[...], preferred_element_type=jnp.float32)
        res = acc_ref[...] + lora
        if has_bias:
            res = res + bias_ref[...].astype(jnp.float32)
        o_ref[...] = res.astype(o_ref.dtype)


def prepare_lora_weights(w, bias, lora_a, lora_b, *, tn=None, tk=None):
    """One-time (weight-load-time) padding + transposition of the parameters.

    Hoisted out of the per-call forward so the weight matrices are never
    re-padded / re-laid-out on every call (only x is padded per call).
    """
    out_f, in_f = w.shape
    rank = lora_a.shape[0]
    assert lora_a.shape == (rank, in_f)
    assert lora_b.shape == (out_f, rank)
    assert rank <= RANK_PAD, "LoRA rank > 128 not supported by this kernel"

    if tn is None:
        tn = _pick_tile(out_f, (512, 384, 256, 128))
    if tk is None:
        tk = _pick_tile(in_f, (1024, 512, 256, 128))
    n_pad = _round_up(out_f, tn)
    k_pad = _round_up(in_f, tk)

    # Pre-transposed, zero-padded layouts: every in-kernel matmul is (m,k)@(k,n).
    wt = jnp.zeros((k_pad, n_pad), w.dtype).at[:in_f, :out_f].set(w.T)
    at = jnp.zeros((k_pad, RANK_PAD), lora_a.dtype).at[:in_f, :rank].set(lora_a.T)
    bt = jnp.zeros((RANK_PAD, n_pad), lora_b.dtype).at[:rank, :out_f].set(lora_b.T)
    bias2 = None
    if bias is not None:
        bias2 = jnp.zeros((1, n_pad), bias.dtype).at[0, :out_f].set(bias)

    return dict(wt=wt, at=at, bt=bt, bias=bias2,
                out_features=out_f, in_features=in_f, rank=rank,
                tn=tn, tk=tk, n_pad=n_pad, k_pad=k_pad)


def lora_linear_forward(x, prep):
    """Pallas forward: out = x @ W^T + bias + (x @ A^T) @ B^T."""
    out_f, in_f = prep["out_features"], prep["in_features"]
    rank = prep["rank"]
    tn, tk = prep["tn"], prep["tk"]
    n_pad, k_pad = prep["n_pad"], prep["k_pad"]
    wt, at, bt, bias2 = prep["wt"], prep["at"], prep["bt"], prep["bias"]
    has_bias = bias2 is not None

    lead = x.shape[:-1]
    x2 = x.reshape(-1, in_f)
    m = x2.shape[0]

    # M tiling: single M tile when M is modest (W streams from HBM exactly
    # once); otherwise pick tm from a ladder minimizing padding waste.
    if m <= 1024:
        tm = _round_up(max(m, SUBLANE), SUBLANE)
    else:
        tm = _pick_tile(m, (512, 384, 256, 128))
    m_pad = _round_up(m, tm)

    # Per-call padding of x only (weights were padded once at load time).
    if (m_pad, k_pad) != (m, in_f):
        x2 = jnp.pad(x2, ((0, m_pad - m), (0, k_pad - in_f)))

    m_grid = m_pad // tm
    n_grid = n_pad // tn
    k_grid = k_pad // tk

    x_bytes = x2.dtype.itemsize
    w_bytes = wt.dtype.itemsize
    o_bytes = jnp.dtype(x.dtype).itemsize
    # Steady-state VMEM footprint (double-buffered streams + f32 accumulator).
    footprint = (2 * (tm * tk * x_bytes + tk * tn * w_bytes + tm * RANK_PAD * 4
                      + RANK_PAD * tn * w_bytes + tn * w_bytes + tm * tn * o_bytes)
                 + tm * tn * 4)
    vmem_limit = int(min(48 * _MIB, max(32 * _MIB, footprint * 3 // 2)))

    # ---- stage 1: mid = x @ A^T (tiny rank-wide GEMM, hoisted out of hot loop)
    mid = pl.pallas_call(
        _lora_a_kernel,
        out_shape=jax.ShapeDtypeStruct((m_pad, RANK_PAD), jnp.float32),
        grid_spec=pltpu.PrefetchScalarGridSpec(
            num_scalar_prefetch=0,
            grid=(m_grid, k_grid),
            in_specs=[
                pl.BlockSpec((tm, tk), lambda i, k: (i, k)),        # x
                pl.BlockSpec((tk, RANK_PAD), lambda i, k: (k, 0)),  # A^T
            ],
            out_specs=pl.BlockSpec((tm, RANK_PAD), lambda i, k: (i, 0)),
            scratch_shapes=[pltpu.VMEM((tm, RANK_PAD), jnp.float32)]),
        compiler_params=pltpu.CompilerParams(
            dimension_semantics=("parallel", "arbitrary"),
            vmem_limit_bytes=vmem_limit),
        cost_estimate=pl.CostEstimate(
            flops=2 * m * in_f * rank, transcendentals=0,
            bytes_accessed=(x2.size * x_bytes + at.size * at.dtype.itemsize
                            + m_pad * RANK_PAD * 4)),
    )(x2, at)

    # ---- stage 2: out = x @ W^T + mid @ B^T [+ bias]
    # Lead the grid with the larger of (Ngrid, Mgrid) so the v7x megacore split
    # stays balanced; K is innermost ("arbitrary") with an f32 accumulator.
    if n_grid >= m_grid:
        grid = (n_grid, m_grid, k_grid)
        x_map = lambda j, i, k: (i, k)
        w_map = lambda j, i, k: (k, j)
        mid_map = lambda j, i, k: (i, 0)
        b_map = lambda j, i, k: (0, j)
        bias_map = lambda j, i, k: (0, j)
        o_map = lambda j, i, k: (i, j)
    else:
        grid = (m_grid, n_grid, k_grid)
        x_map = lambda i, j, k: (i, k)
        w_map = lambda i, j, k: (k, j)
        mid_map = lambda i, j, k: (i, 0)
        b_map = lambda i, j, k: (0, j)
        bias_map = lambda i, j, k: (0, j)
        o_map = lambda i, j, k: (i, j)

    in_specs = [
        pl.BlockSpec((tm, tk), x_map),          # x
        pl.BlockSpec((tk, tn), w_map),          # W^T
        pl.BlockSpec((tm, RANK_PAD), mid_map),  # x @ A^T (finalize only)
        pl.BlockSpec((RANK_PAD, tn), b_map),    # B^T
    ]
    inputs = [x2, wt, mid, bt]
    if has_bias:
        in_specs.append(pl.BlockSpec((1, tn), bias_map))
        inputs.append(bias2)

    flops = 2 * m * out_f * in_f + 2 * m * out_f * rank
    bytes_accessed = (x2.size * x_bytes + wt.size * w_bytes
                      + mid.size * 4 + bt.size * bt.dtype.itemsize
                      + (bias2.size * bias2.dtype.itemsize if has_bias else 0)
                      + m_pad * n_pad * o_bytes)

    out = pl.pallas_call(
        functools.partial(_lora_linear_kernel, has_bias=has_bias),
        out_shape=jax.ShapeDtypeStruct((m_pad, n_pad), x.dtype),
        grid_spec=pltpu.PrefetchScalarGridSpec(
            num_scalar_prefetch=0,
            grid=grid,
            in_specs=in_specs,
            out_specs=pl.BlockSpec((tm, tn), o_map),
            scratch_shapes=[pltpu.VMEM((tm, tn), jnp.float32)]),
        compiler_params=pltpu.CompilerParams(
            dimension_semantics=("parallel", "parallel", "arbitrary"),
            vmem_limit_bytes=vmem_limit),
        cost_estimate=pl.CostEstimate(
            flops=flops, transcendentals=0, bytes_accessed=bytes_accessed),
    )(*inputs)

    out = out[:m, :out_f]
    return out.reshape(*lead, out_f)


if __name__ == "__main__":
    # Small shapes consistent with the module's forward:
    # batch=2, seq=8, in_features=32, out_features=64, reduced_rank=16.
    batch, seq = 2, 8
    in_features, out_features, rank = 32, 64, 16

    key = jax.random.PRNGKey(0)
    kx, kw, kb, ka, kB = jax.random.split(key, 5)

    x = jax.random.normal(kx, (batch, seq, in_features), dtype=jnp.float32)
    w = jax.random.normal(kw, (out_features, in_features), dtype=jnp.float32) * 0.1
    bias = jax.random.normal(kb, (out_features,), dtype=jnp.float32) * 0.1
    lora_a = jax.random.normal(ka, (rank, in_features), dtype=jnp.float32) * 0.1
    lora_b = jax.random.normal(kB, (out_features, rank), dtype=jnp.float32) * 0.1
    # NOTE: LoftQ `quantize()` would set these weights via the iterative
    # quantize/SVD procedure; forward semantics are identical regardless of
    # the values, so we initialize deterministically instead.

    prep = prepare_lora_weights(w, bias, lora_a, lora_b)   # weight-load time
    out = lora_linear_forward(x, prep)                     # per-call path
    out = jax.block_until_ready(out)

    # Pure-JAX reference check of the forward semantics.
    ref = x @ w.T + bias + (x @ lora_a.T) @ lora_b.T
    assert out.shape == (batch, seq, out_features)
    assert jnp.allclose(out, ref, atol=1e-4, rtol=1e-4), "mismatch vs reference"

    print("KERNEL_OK")
</pallas_src>

<mosaic_0001>
module attributes {stable_mosaic.version = 11 : i64} {
  func.func @_lora_a_kernel(%arg0: i32, %arg1: i32, %arg2: memref<16x128xf32, #tpu.memory_space<vmem>>, %arg3: memref<128x128xf32, #tpu.memory_space<vmem>>, %arg4: memref<16x128xf32, #tpu.memory_space<vmem>>, %arg5: memref<16x128xf32, #tpu.memory_space<vmem>>) attributes {dimension_semantics = [#tpu.dimension_semantics<parallel>, #tpu.dimension_semantics<arbitrary>], iteration_bounds = array<i64: 1, 1>, scalar_prefetch = 0 : i64, scratch_operands = 1 : i64, tpu.core_type = #tpu.core_type<tc>, window_params = [{transform_indices = @transform_0, window_bounds = array<i64: 16, 128>}, {transform_indices = @transform_1, window_bounds = array<i64: 128, 128>}, {transform_indices = @transform_2, window_bounds = array<i64: 16, 128>}]} {
    %c0_i32 = arith.constant 0 : i32
    %0 = arith.cmpi eq, %arg1, %c0_i32 : i32
    %1 = arith.extui %0 : i1 to i32
    %c0_i32_0 = arith.constant 0 : i32
    %2 = arith.cmpi ne, %1, %c0_i32_0 : i32
    scf.if %2 {
      %cst_10 = arith.constant 0.000000e+00 : f32
      %12 = vector.broadcast %cst_10 : f32 to vector<16x128xf32>
      %c0_11 = arith.constant 0 : index
      %c0_12 = arith.constant 0 : index
      %13 = vector.load %arg5[%c0_11, %c0_12] : memref<16x128xf32, #tpu.memory_space<vmem>>, vector<16x128xf32>
      tpu.vector_store %arg5[%c0_11, %c0_12], %12 {strides = array<i32>} : memref<16x128xf32, #tpu.memory_space<vmem>>, vector<16x128xf32>,
    } else {
    }
    %c0 = arith.constant 0 : index
    %c0_1 = arith.constant 0 : index
    %3 = vector.load %arg5[%c0, %c0_1] : memref<16x128xf32, #tpu.memory_space<vmem>>, vector<16x128xf32>
    %c0_2 = arith.constant 0 : index
    %c0_3 = arith.constant 0 : index
    %4 = vector.load %arg2[%c0_2, %c0_3] : memref<16x128xf32, #tpu.memory_space<vmem>>, vector<16x128xf32>
    %c0_4 = arith.constant 0 : index
    %c0_5 = arith.constant 0 : index
    %5 = vector.load %arg3[%c0_4, %c0_5] : memref<128x128xf32, #tpu.memory_space<vmem>>, vector<128x128xf32>
    %cst = arith.constant dense<0.000000e+00> : vector<16x128xf32>
    %6 = tpu.matmul %4, %5, %cst {dimension_numbers = #tpu.dot_dimension_numbers<[1], [0], [0], [1], [0, 0, 1, 1], [], []>} : vector<16x128xf32>, vector<128x128xf32>, vector<16x128xf32> -> vector<16x128xf32>
    %7 = arith.addf %3, %6 : vector<16x128xf32>
    %c0_6 = arith.constant 0 : index
    %c0_7 = arith.constant 0 : index
    %8 = vector.load %arg5[%c0_6, %c0_7] : memref<16x128xf32, #tpu.memory_space<vmem>>, vector<16x128xf32>
    tpu.vector_store %arg5[%c0_6, %c0_7], %7 {strides = array<i32>} : memref<16x128xf32, #tpu.memory_space<vmem>>, vector<16x128xf32>,
    %c0_i32_8 = arith.constant 0 : i32
    %9 = arith.cmpi eq, %arg1, %c0_i32_8 : i32
    %10 = arith.extui %9 : i1 to i32
    %c0_i32_9 = arith.constant 0 : i32
    %11 = arith.cmpi ne, %10, %c0_i32_9 : i32
    scf.if %11 {
      %c0_10 = arith.constant 0 : index
      %c0_11 = arith.constant 0 : index
      %12 = vector.load %arg5[%c0_10, %c0_11] : memref<16x128xf32, #tpu.memory_space<vmem>>, vector<16x128xf32>
      %c0_12 = arith.constant 0 : index
      %c0_13 = arith.constant 0 : index
      %13 = vector.load %arg4[%c0_12, %c0_13] : memref<16x128xf32, #tpu.memory_space<vmem>>, vector<16x128xf32>
      tpu.vector_store %arg4[%c0_12, %c0_13], %12 {strides = array<i32>} : memref<16x128xf32, #tpu.memory_space<vmem>>, vector<16x128xf32>,
    } else {
    }
    return
  }
  func.func @transform_0(%arg0: i32, %arg1: i32) -> (i32, i32) {
    %c0_i32 = arith.constant 0 : i32
    return %arg0, %arg1 : i32, i32
  }
  func.func @transform_1(%arg0: i32, %arg1: i32) -> (i32, i32) {
    %c0_i32 = arith.constant 0 : i32
    %c0_i32_0 = arith.constant 0 : i32
    return %arg1, %c0_i32 : i32, i32
  }
  func.func @transform_2(%arg0: i32, %arg1: i32) -> (i32, i32) {
    %c0_i32 = arith.constant 0 : i32
    %c0_i32_0 = arith.constant 0 : i32
    return %arg0, %c0_i32 : i32, i32
  }
}

</mosaic_0001>

<llo_original>
// kernel: tpu_custom_call.1
$region0: #{tpu_custom_call.1}
  #allocation0 [shape = 'u32[]', space=smem, size = 0x4, offset = 0x4, fixed_abs, tag = 'smem constant byte address 0x4 - core index']
  #allocation1 [shape = 'u32[144,128]{1,0:T(1,128)}', space=vmem, size = 0x12000, scoped, tag = 'internal scratch']
  #allocation2 [shape = 'f32[16,128]{1,0:T(8,128)}', space=vmem, size = 0x2000, scoped, tag = 'scratch operand']
  %s0 = inlined_call_operand.hbm [shape: f32[16,128], index: 0, kind: input, shape index: {}]
  %s1 = inlined_call_operand.hbm [shape: f32[128,128], index: 1, kind: input, shape index: {}]
  %s2 = inlined_call_operand.hbm [shape: f32[16,128], index: 2, kind: output, shape index: {}]
  %s3 = sld [smem:[#allocation0]]
  $region34: #{tpu_custom_call.1} parent=0
    _
  %s5 = ssub.s32 1, %s3
  %s6 = scalar_select 0, %s5, %s3
  $region1: #{tpu_custom_call.1} parent=0
    #allocation3 [shape = 'u8[8192]{0}', space=vmem, size = 0x2000, scoped, tag = 'input window, operand 0, single buffered']
    #allocation4 [shape = 's32[1]{0}', space=sflag, size = 0x4, scoped, tag = 'scoped memory for tpu_custom_call.1']
    #allocation5 [shape = 's32[1]{0}', space=sflag, size = 0x4, scoped, tag = 'scoped memory for tpu_custom_call.1']
    #allocation6 [shape = 'u8[65536]{0}', space=vmem, size = 0x10000, scoped, tag = 'input window, operand 1, single buffered']
    #allocation7 [shape = 's32[1]{0}', space=sflag, size = 0x4, scoped, tag = 'scoped memory for tpu_custom_call.1']
    #allocation8 [shape = 'u8[8192]{0}', space=vmem, size = 0x2000, scoped, tag = 'output window, operand 0, single buffered']
    %7 = vsyncpa [#allocation4], 0
    %8 = vsyncpa [#allocation7], 0
    %9 = vsyncpa [#allocation5], 0
    // Predicated region
    $region2: #{tpu_custom_call.1} parent=1 // pred_check
      _
    $region3: #{tpu_custom_call.1} parent=1 // pred_check_branch
      %11 = sbr.rel (0) target = $region5
    $region4: #{tpu_custom_call.1} parent=1 // pred_region
      %s13 = ssub.s32 256, 256
      %14 = vsyncadd [#allocation4], %s13
      %s15 = sshll.u32 [#allocation3], 4
      %s16 = int_to_ptr.vmem [resolvable:$true] %s15
      %21 = dma.hbm_to_vmem [thread:$0]  %s0, 256, %s16, [#allocation4], 128, 128, 8
    $region5: #{tpu_custom_call.1} parent=1 // pred_fallthru
      _
    // Predicated region
    $region6: #{tpu_custom_call.1} parent=1 // pred_check
      _
    $region7: #{tpu_custom_call.1} parent=1 // pred_check_branch
      %23 = sbr.rel (0) target = $region9
    $region8: #{tpu_custom_call.1} parent=1 // pred_region
      %s25 = ssub.s32 2048, 2048
      %26 = vsyncadd [#allocation7], %s25
      %s27 = sshll.u32 [#allocation6], 4
      %s28 = int_to_ptr.vmem [resolvable:$true] %s27
      %33 = dma.hbm_to_vmem [thread:$0]  %s1, 2048, %s28, [#allocation7], 128, 128, 8
    $region9: #{tpu_custom_call.1} parent=1 // pred_fallthru
      _
    // Predicated region
    $region10: #{tpu_custom_call.1} parent=1 // pred_check
      _
    $region11: #{tpu_custom_call.1} parent=1 // pred_check_branch
      %35 = sbr.rel (0) target = $region13
    $region12: #{tpu_custom_call.1} parent=1 // pred_region
      %36 = dma.done [#allocation4], 256
    $region13: #{tpu_custom_call.1} parent=1 // pred_fallthru
      _
    // Predicated region
    $region14: #{tpu_custom_call.1} parent=1 // pred_check
      _
    $region15: #{tpu_custom_call.1} parent=1 // pred_check_branch
      %38 = sbr.rel (0) target = $region17
    $region16: #{tpu_custom_call.1} parent=1 // pred_region
      %39 = dma.done [#allocation7], 2048
    $region17: #{tpu_custom_call.1} parent=1 // pred_fallthru
      _
    %p40 = scmp.eq.s32.totalorder 0, 0
    // Predicated region
    $region18: #{tpu_custom_call.1} parent=1 // pred_check
      %p41 = pneg %p40
    $region19: #{tpu_custom_call.1} parent=1 // pred_check_branch
      %43 = sbr.rel (%p41) target = $region21
    $region20: #{tpu_custom_call.1} parent=1 // pred_region
      %44 = vst [vmem:[#allocation2] sm:$0xff] 0.0
      %45 = vst [vmem:[#allocation2 + $0x8] sm:$0xff] 0.0
    $region21: #{tpu_custom_call.1} parent=1 // pred_fallthru
      _
    %v46 = vld [vmem:[#allocation2] sm:$0xff]
    %v47 = vld [vmem:[#allocation2 + $0x8] sm:$0xff]
    %v48 = vld [vmem:[#allocation3] sm:$0xff]
    %v49 = vld [vmem:[#allocation3 + $0x8] sm:$0xff]
    %v50 = vld [vmem:[#allocation6] sm:$0xff]
    %v51 = vld [vmem:[#allocation6 + $0x8] sm:$0xff]
    %v52 = vld [vmem:[#allocation6 + $0x10] sm:$0xff]
    %v53 = vld [vmem:[#allocation6 + $0x18] sm:$0xff]
    %v54 = vld [vmem:[#allocation6 + $0x20] sm:$0xff]
    %v55 = vld [vmem:[#allocation6 + $0x28] sm:$0xff]
    %v56 = vld [vmem:[#allocation6 + $0x30] sm:$0xff]
    %v57 = vld [vmem:[#allocation6 + $0x38] sm:$0xff]
    %v58 = vld [vmem:[#allocation6 + $0x40] sm:$0xff]
    %v59 = vld [vmem:[#allocation6 + $0x48] sm:$0xff]
    %v60 = vld [vmem:[#allocation6 + $0x50] sm:$0xff]
    %v61 = vld [vmem:[#allocation6 + $0x58] sm:$0xff]
    %v62 = vld [vmem:[#allocation6 + $0x60] sm:$0xff]
    %v63 = vld [vmem:[#allocation6 + $0x68] sm:$0xff]
    %v64 = vld [vmem:[#allocation6 + $0x70] sm:$0xff]
    %v65 = vld [vmem:[#allocation6 + $0x78] sm:$0xff]
    %66 = vmatprep.subr.mxu0 0.0
    %67 = vmatpush1.msra.mxu0 %v50
    %68 = vmatprep.subr.mxu0 0.0
    %69 = vmatpush1.msra.mxu0 %v51
    %70 = vmatprep.subr.mxu0 0.0
    %71 = vmatpush1.msra.mxu0 %v52
    %72 = vmatprep.subr.mxu0 0.0
    %73 = vmatpush1.msra.mxu0 %v53
    %74 = vmatprep.subr.mxu0 0.0
    %75 = vmatpush1.msra.mxu0 %v54
    %76 = vmatprep.subr.mxu0 0.0
    %77 = vmatpush1.msra.mxu0 %v55
    %78 = vmatprep.subr.mxu0 0.0
    %79 = vmatpush1.msra.mxu0 %v56
    %80 = vmatprep.subr.mxu0 0.0
    %81 = vmatpush1.msra.mxu0 %v57
    %82 = vmatprep.subr.mxu0 0.0
    %83 = vmatpush1.msra.mxu0 %v58
    %84 = vmatprep.subr.mxu0 0.0
    %85 = vmatpush1.msra.mxu0 %v59
    %86 = vmatprep.subr.mxu0 0.0
    %87 = vmatpush1.msra.mxu0 %v60
    %88 = vmatprep.subr.mxu0 0.0
    %89 = vmatpush1.msra.mxu0 %v61
    %90 = vmatprep.subr.mxu0 0.0
    %91 = vmatpush1.msra.mxu0 %v62
    %92 = vmatprep.subr.mxu0 0.0
    %93 = vmatpush1.msra.mxu0 %v63
    %94 = vmatprep.subr.mxu0 0.0
    %95 = vmatpush1.msra.mxu0 %v64
    %96 = vmatprep.subr.mxu0 0.0
    %97 = vmatpush1.msra.mxu0 %v65
    %98 = vmatprep.subr.mxu0 0.0
    %99 = vmatpush1.msra.mxu0 0.0
    %100 = vmatprep.subr.mxu0 0.0
    %101 = vmatpush1.msra.mxu0 0.0
    %102 = vmatprep.subr.mxu0 0.0
    %103 = vmatpush1.msra.mxu0 0.0
    %104 = vmatprep.subr.mxu0 0.0
    %105 = vmatpush1.msra.mxu0 0.0
    %106 = vmatprep.subr.mxu0 0.0
    %107 = vmatpush1.msra.mxu0 0.0
    %108 = vmatprep.subr.mxu0 0.0
    %109 = vmatpush1.msra.mxu0 0.0
    %110 = vmatprep.subr.mxu0 0.0
    %111 = vmatpush1.msra.mxu0 0.0
    %112 = vmatprep.subr.mxu0 0.0
    %113 = vmatpush1.msra.mxu0 0.0
    %114 = vmatprep.subr.mxu0 0.0
    %115 = vmatpush1.msra.mxu0 0.0
    %116 = vmatprep.subr.mxu0 0.0
    %117 = vmatpush1.msra.mxu0 0.0
    %118 = vmatprep.subr.mxu0 0.0
    %119 = vmatpush1.msra.mxu0 0.0
    %120 = vmatprep.subr.mxu0 0.0
    %121 = vmatpush1.msra.mxu0 0.0
    %122 = vmatprep.subr.mxu0 0.0
    %123 = vmatpush1.msra.mxu0 0.0
    %124 = vmatprep.subr.mxu0 0.0
    %125 = vmatpush1.msra.mxu0 0.0
    %126 = vmatprep.subr.mxu0 0.0
    %127 = vmatpush1.msra.mxu0 0.0
    %128 = vmatprep.subr.mxu0 0.0
    %129 = vmatpush1.msra.mxu0 0.0
    %130 = vmatprep.mubr.f32.mxu0 0.0
    %131 = vmatmul.mubr.f32.gmra.mrb[0].mxu0 %v48
    %v132 = vpop.f32.mrb[0].mxu0
    %v133 = vadd.f32 0.0, %v132
    %v134 = vpop.f32.mrb[0].mxu0
    %135 = vmatprep.mubr.f32.mxu0 0.0
    %136 = vmatmul.mubr.f32.gmra.mrb[0].mxu0 %v49
    %v137 = vpop.f32.mrb[0].mxu0
    %v138 = vadd.f32 0.0, %v137
    %v139 = vpop.f32.mrb[0].mxu0
    %140 = vdwg.mxu0
    %v141 = vadd.f32 %v46, %v133
    %v142 = vadd.f32 %v47, %v138
    %143 = vst [vmem:[#allocation2] sm:$0xff] %v141
    %144 = vst [vmem:[#allocation2 + $0x8] sm:$0xff] %v142
    // Predicated region
    $region22: #{tpu_custom_call.1} parent=1 // pred_check
      %p145 = pneg %p40
    $region23: #{tpu_custom_call.1} parent=1 // pred_check_branch
      %147 = sbr.rel (%p145) target = $region25
    $region24: #{tpu_custom_call.1} parent=1 // pred_region
      %v148 = vld [vmem:[#allocation2] sm:$0xff]
      %v149 = vld [vmem:[#allocation2 + $0x8] sm:$0xff]
      %150 = vst [vmem:[#allocation8] sm:$0xff] %v148
      %151 = vst [vmem:[#allocation8 + $0x8] sm:$0xff] %v149
    $region25: #{tpu_custom_call.1} parent=1 // pred_fallthru
      _
    // Predicated region
    $region26: #{tpu_custom_call.1} parent=1 // pred_check
      _
    $region27: #{tpu_custom_call.1} parent=1 // pred_check_branch
      %153 = sbr.rel (0) target = $region29
    $region28: #{tpu_custom_call.1} parent=1 // pred_region
      %s155 = ssub.s32 256, 256
      %156 = vsyncadd [#allocation5], %s155
      %s157 = sshll.u32 [#allocation8], 4
      %s158 = int_to_ptr.vmem [resolvable:$true] %s157
      %163 = dma.vmem_to_hbm [thread:$0]  %s158, 256, %s2, [#allocation5], 128, 128, 8
    $region29: #{tpu_custom_call.1} parent=1 // pred_fallthru
      _
    // Predicated region
    $region30: #{tpu_custom_call.1} parent=1 // pred_check
      _
    $region31: #{tpu_custom_call.1} parent=1 // pred_check_branch
      %165 = sbr.rel (0) target = $region33
    $region32: #{tpu_custom_call.1} parent=1 // pred_region
      %166 = dma.done [#allocation5], 256
    $region33: #{tpu_custom_call.1} parent=1 // pred_fallthru
      _
    %167 = vsyncpa [#allocation4], 1
    %168 = vsyncpa [#allocation7], 1
    %169 = vsyncpa [#allocation5], 1

</llo_original>
